<compile_context>
chip_gen: v6e
topology: v6e:2x2x1
jax: 0.10.0
libtpu: 0.0.40
codegen_flags: <defaults>
</compile_context>

<pallas_src>
import functools

import jax
import jax.numpy as jnp
from jax.experimental import pallas as pl
from jax.experimental.pallas import tpu as pltpu


def _affine_kernel(x_ref, w_ref, b_ref, o_ref):
    # One MXU matmul per batch tile (f32 accumulation) + bias add on the VPU.
    acc = jnp.dot(x_ref[...], w_ref[...], preferred_element_type=jnp.float32)
    o_ref[...] = (acc + b_ref[...]).astype(o_ref.dtype)


def simple_model_forward(x, w1, b1, w2, b2, *, batch_tile=1024,
                         min_pallas_batch=None):
    """Forward pass of SimpleModel.

    x: (B, 10), w1: (10, 20), b1: (1, 20), w2: (20, 5), b2: (1, 5) -> (B, 5).

    batch_tile: rows per grid step (multiple of 8). 1024-4096 keeps the
      pipeline bandwidth-bound rather than step-overhead-bound; on v7x push
      larger (2048-8192) but keep >=2 grid steps so megacore can split the
      batch across the two TensorCores.
    min_pallas_batch: below this batch size, fall back to plain jnp (the
      pallas_call launch overhead dominates a few-hundred-FLOP problem).
      Defaults to batch_tile.
    """
    # ---- fold fc1/fc2 into one affine op (exact: no activation in between) --
    # Note: folding changes the reduction order vs the unfused two-layer f32
    # model, so results are numerically close but not bit-identical.
    w = jnp.dot(w1, w2)        # (10, 5)
    b = jnp.dot(b1, w2) + b2   # (1, 5)

    B, in_features = x.shape
    out_features = w.shape[1]

    if min_pallas_batch is None:
        min_pallas_batch = batch_tile
    if B < min_pallas_batch:
        # Tiny-batch path: XLA's fused dot+add is strictly faster here.
        return (x @ w + b).astype(jnp.float32)

    tb = batch_tile
    grid = (pl.cdiv(B, tb),)   # last block is partial; Pallas edge-clips it.

    cost = pl.CostEstimate(
        flops=2 * B * in_features * out_features,
        transcendentals=0,
        bytes_accessed=4 * (B * in_features + B * out_features
                            + in_features * out_features + out_features),
    )

    out = pl.pallas_call(
        _affine_kernel,
        out_shape=jax.ShapeDtypeStruct((B, out_features), jnp.float32),
        grid_spec=pl.GridSpec(
            grid=grid,
            in_specs=[
                # batch-tiled activations, read directly in f32 (no wrapper
                # cast/pad pass; the input read is not the bottleneck).
                pl.BlockSpec((tb, in_features), lambda i: (i, 0)),
                # folded weight / bias stay VMEM-resident across grid steps.
                pl.BlockSpec((in_features, out_features), lambda i: (0, 0)),
                pl.BlockSpec((1, out_features), lambda i: (0, 0)),
            ],
            # Narrow (tb, 5) output block: masked vst is cheap vs the HBM DMA
            # it saves; no padded slab written to HBM, no wrapper slice.
            out_specs=pl.BlockSpec((tb, out_features), lambda i: (i, 0)),
        ),
        compiler_params=pltpu.CompilerParams(
            # Megacore split of the batch axis on v7x; neutral on v5e/v6e.
            dimension_semantics=("parallel",),
        ),
        cost_estimate=cost,
    )(x.astype(jnp.float32), w, b)

    return out


def init_params(key):
    """Deterministic init mimicking PyTorch nn.Linear (uniform +/- 1/sqrt(fan_in))."""
    k1, k2, k3, k4 = jax.random.split(key, 4)
    bound1 = 1.0 / jnp.sqrt(10.0)
    bound2 = 1.0 / jnp.sqrt(20.0)
    w1 = jax.random.uniform(k1, (10, 20), jnp.float32, -bound1, bound1)
    b1 = jax.random.uniform(k2, (1, 20), jnp.float32, -bound1, bound1)
    w2 = jax.random.uniform(k3, (20, 5), jnp.float32, -bound2, bound2)
    b2 = jax.random.uniform(k4, (1, 5), jnp.float32, -bound2, bound2)
    return w1, b1, w2, b2


if __name__ == "__main__":
    key = jax.random.PRNGKey(0)
    kx, kp = jax.random.split(key)

    # Small demo shape: 300 rows is NOT a multiple of the 128-row demo tile,
    # so we exercise 3 grid steps including a clipped partial last block.
    batch = 300
    x = jax.random.normal(kx, (batch, 10), jnp.float32)
    w1, b1, w2, b2 = init_params(kp)

    # Force the Pallas path (min_pallas_batch=0) with a small tile so the
    # kernel itself runs at demo size; real callers keep the larger defaults.
    fwd = functools.partial(simple_model_forward, batch_tile=128,
                            min_pallas_batch=0)
    out = fwd(x, w1, b1, w2, b2)
    out = jax.block_until_ready(out)

    # Reference: the original (unfolded) two-layer forward in f32.
    ref = (x @ w1 + b1) @ w2 + b2
    assert out.shape == (batch, 5), out.shape
    # All-f32 path; only the fc1/fc2 fold changes reduction order.
    assert jnp.allclose(out, ref, atol=1e-4, rtol=1e-4), "mismatch vs reference"

    # Also sanity-check the small-batch jnp fallback path (default thresholds).
    small = simple_model_forward(x[:8], w1, b1, w2, b2)
    assert jnp.allclose(small, ref[:8], atol=1e-4, rtol=1e-4)

    print("KERNEL_OK")
</pallas_src>

<mosaic_0001>
module attributes {stable_mosaic.version = 11 : i64} {
  func.func @_affine_kernel(%arg0: i32, %arg1: memref<128x10xf32, #tpu.memory_space<vmem>>, %arg2: memref<10x5xf32, #tpu.memory_space<vmem>>, %arg3: memref<1x5xf32, #tpu.memory_space<vmem>>, %arg4: memref<128x5xf32, #tpu.memory_space<vmem>>) attributes {dimension_semantics = [#tpu.dimension_semantics<parallel>], iteration_bounds = array<i64: 3>, scalar_prefetch = 0 : i64, scratch_operands = 0 : i64, tpu.core_type = #tpu.core_type<tc>, window_params = [{transform_indices = @transform_0, window_bounds = array<i64: 128, 10>}, {pipeline_mode = #tpu.pipeline_mode<synchronous>, transform_indices = @transform_1, window_bounds = array<i64: 10, 5>}, {pipeline_mode = #tpu.pipeline_mode<synchronous>, transform_indices = @transform_2, window_bounds = array<i64: 1, 5>}, {transform_indices = @transform_3, window_bounds = array<i64: 128, 5>}]} {
    %c0 = arith.constant 0 : index
    %c0_0 = arith.constant 0 : index
    %0 = vector.load %arg1[%c0, %c0_0] : memref<128x10xf32, #tpu.memory_space<vmem>>, vector<128x10xf32>
    %c0_1 = arith.constant 0 : index
    %c0_2 = arith.constant 0 : index
    %1 = vector.load %arg2[%c0_1, %c0_2] : memref<10x5xf32, #tpu.memory_space<vmem>>, vector<10x5xf32>
    %cst = arith.constant dense<0.000000e+00> : vector<128x5xf32>
    %2 = tpu.matmul %0, %1, %cst {dimension_numbers = #tpu.dot_dimension_numbers<[1], [0], [0], [1], [0, 0, 1, 1], [], []>} : vector<128x10xf32>, vector<10x5xf32>, vector<128x5xf32> -> vector<128x5xf32>
    %c0_3 = arith.constant 0 : index
    %c0_4 = arith.constant 0 : index
    %3 = vector.load %arg3[%c0_3, %c0_4] : memref<1x5xf32, #tpu.memory_space<vmem>>, vector<1x5xf32>
    %4 = vector.broadcast %3 : vector<1x5xf32> to vector<128x5xf32>
    %5 = arith.addf %2, %4 : vector<128x5xf32>
    %c0_5 = arith.constant 0 : index
    %c0_6 = arith.constant 0 : index
    %6 = vector.load %arg4[%c0_5, %c0_6] : memref<128x5xf32, #tpu.memory_space<vmem>>, vector<128x5xf32>
    tpu.vector_store %arg4[%c0_5, %c0_6], %5 {strides = array<i32>} : memref<128x5xf32, #tpu.memory_space<vmem>>, vector<128x5xf32>,
    return
  }
  func.func @transform_0(%arg0: i32) -> (i32, i32) {
    %c0_i32 = arith.constant 0 : i32
    %c0_i32_0 = arith.constant 0 : i32
    return %arg0, %c0_i32 : i32, i32
  }
  func.func @transform_1(%arg0: i32) -> (i32, i32) {
    %c0_i32 = arith.constant 0 : i32
    %c0_i32_0 = arith.constant 0 : i32
    %c0_i32_1 = arith.constant 0 : i32
    return %c0_i32, %c0_i32_0 : i32, i32
  }
  func.func @transform_2(%arg0: i32) -> (i32, i32) {
    %c0_i32 = arith.constant 0 : i32
    %c0_i32_0 = arith.constant 0 : i32
    %c0_i32_1 = arith.constant 0 : i32
    return %c0_i32, %c0_i32_0 : i32, i32
  }
  func.func @transform_3(%arg0: i32) -> (i32, i32) {
    %c0_i32 = arith.constant 0 : i32
    %c0_i32_0 = arith.constant 0 : i32
    return %arg0, %c0_i32 : i32, i32
  }
}

</mosaic_0001>

<llo_original>
// kernel: tpu_custom_call.1
$region0: #{tpu_custom_call.1}
  #allocation0 [shape = 'u32[]', space=smem, size = 0x4, offset = 0x4, fixed_abs, tag = 'smem constant byte address 0x4 - core index']
  #allocation1 [shape = 'u32[144,128]{1,0:T(1,128)}', space=vmem, size = 0x12000, scoped, tag = 'internal scratch']
  %s0 = inlined_call_operand.vmem [shape: f32[300,10], index: 0, kind: input, shape index: {}]
  %s1 = inlined_call_operand.vmem [shape: f32[10,5], index: 1, kind: input, shape index: {}]
  %s2 = inlined_call_operand.vmem [shape: f32[1,5], index: 2, kind: input, shape index: {}]
  %s3 = inlined_call_operand.vmem [shape: f32[300,5], index: 3, kind: output, shape index: {}]
  %s4 = sld [smem:[#allocation0]]
  $region93: #{tpu_custom_call.1} parent=0
    _
  %s6 = ssub.s32 1, %s4
  %s7 = scalar_select 0, %s6, %s4
  $region1: #{tpu_custom_call.1} parent=0
    #allocation2 [shape = 'u8[131072]{0}', space=vmem, size = 0x20000, scoped, tag = 'output window, operand 0']
    loop: start=0, step=1, limit=5
    $region2: #{tpu_custom_call.1} parent=1 // loop_pre_header
      _
    $region3: #{tpu_custom_call.1} parent=1 // loop_header
      %s9 = sphi 0, %s13
      %p10 = scmp.ge.s32.totalorder %s9, 5
      %s19 = sphi 0, %s21
      %s22 = sphi 0, %s19
      %s23 = sphi 0, %s22
      %s39 = sphi 0, %s23
      %s43 = sphi 0, %s43
      %s45 = sphi 0, %s43
      %s46 = sphi 0, %s45
      %s60 = sphi 0, %s46
      %s64 = sphi 0, %s64
      %s66 = sphi 0, %s64
      %s67 = sphi 0, %s66
      %s81 = sphi 0, %s67
      %s87 = sphi 0, %s89
      %s90 = sphi 0, %s87
      %s91 = sphi 0, %s90
      %s107 = sphi 0, %s91
    $region4: #{tpu_custom_call.1} parent=1 // loop_header_branch
      %12 = sbr.rel (%p10) target = $region8
    $region5: #{tpu_custom_call.1} parent=1 // loop_body
      %s14 = ssub.s32 %s9, 1
      %s15 = ssub.s32 %s9, 2
      %s16 = sadd.s32 %s9, 1
      %s17 = ssub.s32 %s9, %s16
      %p18 = scmp.eq.s32.totalorder %s17, 0
      %s20 = sadd.s32 %s19, 1
      %s21 = scalar_select %p18, %s19, %s20
      %p24 = pneg %p18
      %p25 = scmp.eq.s32.totalorder %s9, 2
      %p26 = por %p24, %p25
      %p27 = scmp.ne.s32.totalorder %s19, %s22
      %p28 = scmp.eq.s32.totalorder %s9, 0
      %p29 = por %p27, %p28
      %p30 = scmp.ne.s32.totalorder %s19, %s22
      %p31 = scmp.eq.s32.totalorder %s14, 2
      %p32 = por %p30, %p31
      %p33 = scmp.ne.s32.totalorder %s22, %s23
      %p34 = scmp.eq.s32.totalorder %s14, 0
      %p35 = por %p33, %p34
      %p36 = scmp.ne.s32.totalorder %s22, %s23
      %p37 = scmp.eq.s32.totalorder %s15, 2
      %p38 = por %p36, %p37
      %p40 = scmp.ne.s32.totalorder %s23, %s39
      %p41 = scmp.eq.s32.totalorder %s15, 0
      %p42 = por %p40, %p41
      %s44 = sadd.s32 %s43, 1
      %p47 = scmp.eq.s32.totalorder %s9, 2
      %p48 = scmp.ne.s32.totalorder %s43, %s45
      %p49 = scmp.eq.s32.totalorder %s9, 0
      %p50 = por %p48, %p49
      %p51 = scmp.ne.s32.totalorder %s43, %s45
      %p52 = scmp.eq.s32.totalorder %s14, 2
      %p53 = por %p51, %p52
      %p54 = scmp.ne.s32.totalorder %s45, %s46
      %p55 = scmp.eq.s32.totalorder %s14, 0
      %p56 = por %p54, %p55
      %p57 = scmp.ne.s32.totalorder %s45, %s46
      %p58 = scmp.eq.s32.totalorder %s15, 2
      %p59 = por %p57, %p58
      %p61 = scmp.ne.s32.totalorder %s46, %s60
      %p62 = scmp.eq.s32.totalorder %s15, 0
      %p63 = por %p61, %p62
      %s65 = sadd.s32 %s64, 1
      %p68 = scmp.eq.s32.totalorder %s9, 2
      %p69 = scmp.ne.s32.totalorder %s64, %s66
      %p70 = scmp.eq.s32.totalorder %s9, 0
      %p71 = por %p69, %p70
      %p72 = scmp.ne.s32.totalorder %s64, %s66
      %p73 = scmp.eq.s32.totalorder %s14, 2
      %p74 = por %p72, %p73
      %p75 = scmp.ne.s32.totalorder %s66, %s67
      %p76 = scmp.eq.s32.totalorder %s14, 0
      %p77 = por %p75, %p76
      %p78 = scmp.ne.s32.totalorder %s66, %s67
      %p79 = scmp.eq.s32.totalorder %s15, 2
      %p80 = por %p78, %p79
      %p82 = scmp.ne.s32.totalorder %s67, %s81
      %p83 = scmp.eq.s32.totalorder %s15, 0
      %p84 = por %p82, %p83
      %s85 = ssub.s32 %s9, %s16
      %p86 = scmp.eq.s32.totalorder %s85, 0
      %s88 = sadd.s32 %s87, 1
      %s89 = scalar_select %p86, %s87, %s88
      %p92 = pneg %p86
      %p93 = scmp.eq.s32.totalorder %s9, 2
      %p94 = por %p92, %p93
      %p95 = scmp.ne.s32.totalorder %s87, %s90
      %p96 = scmp.eq.s32.totalorder %s9, 0
      %p97 = por %p95, %p96
      %p98 = scmp.ne.s32.totalorder %s87, %s90
      %p99 = scmp.eq.s32.totalorder %s14, 2
      %p100 = por %p98, %p99
      %p101 = scmp.ne.s32.totalorder %s90, %s91
      %p102 = scmp.eq.s32.totalorder %s14, 0
      %p103 = por %p101, %p102
      %p104 = scmp.ne.s32.totalorder %s90, %s91
      %p105 = scmp.eq.s32.totalorder %s15, 2
      %p106 = por %p104, %p105
      %p108 = scmp.ne.s32.totalorder %s91, %s107
      %p109 = scmp.eq.s32.totalorder %s15, 0
      %p110 = por %p108, %p109
      %p111 = scmp.le.s32.totalorder 1, %s9
      %p112 = scmp.lt.s32.totalorder %s9, 4
      %p113 = pnand %p111, %p112
      %p114 = pneg %p113
      // Predicated region
      $region9: #{tpu_custom_call.1} parent=5 // pred_check
        _
      $region10: #{tpu_custom_call.1} parent=5 // pred_check_branch
        %116 = sbr.rel (%p113) target = $region12
      $region11: #{tpu_custom_call.1} parent=5 // pred_region
        %s117 = ssub.s32 %s9, 1
        // Predicated region
        $region13: #{tpu_custom_call.1} parent=11 // pred_check
          %p118 = pneg %p56
        $region14: #{tpu_custom_call.1} parent=11 // pred_check_branch
          %120 = sbr.rel (%p118) target = $region16
        $region15: #{tpu_custom_call.1} parent=11 // pred_region
          _
        $region16: #{tpu_custom_call.1} parent=11 // pred_fallthru
          _
        // Predicated region
        $region17: #{tpu_custom_call.1} parent=11 // pred_check
          %p121 = pneg %p77
        $region18: #{tpu_custom_call.1} parent=11 // pred_check_branch
          %123 = sbr.rel (%p121) target = $region20
        $region19: #{tpu_custom_call.1} parent=11 // pred_region
          _
        $region20: #{tpu_custom_call.1} parent=11 // pred_fallthru
          _
      $region12: #{tpu_custom_call.1} parent=5 // pred_fallthru
        _
      %p124 = scmp.lt.s32.totalorder %s9, 3
      // Predicated region
      $region21: #{tpu_custom_call.1} parent=5 // pred_check
        %p125 = pneg %p124
      $region22: #{tpu_custom_call.1} parent=5 // pred_check_branch
        %127 = sbr.rel (%p125) target = $region24
      $region23: #{tpu_custom_call.1} parent=5 // pred_region
        // Predicated region
        $region25: #{tpu_custom_call.1} parent=23 // pred_check
          %p128 = pneg %p29
        $region26: #{tpu_custom_call.1} parent=23 // pred_check_branch
          %130 = sbr.rel (%p128) target = $region28
        $region27: #{tpu_custom_call.1} parent=23 // pred_region
          %s131 = smul.u32 16, %s9
          %s132 = ssub.s32 38, %s131
          %p133 = scmp.lt.s32.totalorder %s132, 16
          %s134 = scalar_select %p133, %s132, 16
          %s135 = smul.u32 128, %s134
          %p136 = scmp.lt.s32.totalorder %s131, 37
          %s137 = scalar_select %p136, %s131, 37
          %s138 = smul.addr %s137, 8
          %s139 = scalar_lea.vmem %s0, %s138
          %s140 = smul.u32 16, %s9
          %s141 = ssub.s32 38, %s140
          %p142 = scmp.lt.s32.totalorder %s141, 16
          %s143 = scalar_select %p142, %s141, 16
          %s144 = smul.u32 128, %s143
        $region28: #{tpu_custom_call.1} parent=23 // pred_fallthru
          _
      $region24: #{tpu_custom_call.1} parent=5 // pred_fallthru
        _
      %p145 = scmp.le.s32.totalorder 1, %s9
      %p146 = scmp.lt.s32.totalorder %s9, 4
      %p147 = pnand %p145, %p146
      %p148 = pneg %p147
      // Predicated region
      $region29: #{tpu_custom_call.1} parent=5 // pred_check
        _
      $region30: #{tpu_custom_call.1} parent=5 // pred_check_branch
        %150 = sbr.rel (%p147) target = $region32
      $region31: #{tpu_custom_call.1} parent=5 // pred_region
        %s151 = ssub.s32 %s9, 1
        %s152 = smul.u32 16, %s14
        %s153 = ssub.s32 38, %s152
        %p154 = scmp.lt.s32.totalorder %s153, 16
        %s155 = scalar_select %p154, %s153, 16
        %s156 = smul.u32 128, %s155
        %p157 = scmp.lt.s32.totalorder %s152, 37
        %s158 = scalar_select %p157, %s152, 37
        %s159 = smul.addr %s158, 8
        %s160 = scalar_lea.vmem %s0, %s159
        %p161 = pneg %p35
        %p162 = pneg %p32
        %p163 = pneg %p56
        %p164 = pneg %p53
        %p165 = pneg %p77
        %p166 = pneg %p74
        %p167 = pneg %p103
        %p168 = pneg %p100
        %s169 = sand.u32 %s90, 1
        %s170 = sand.u32 %s90, 1
        %s171 = smul.addr %s170, 128
        %s172 = scalar_lea.vmem [#allocation2], %s171
        %s173 = smul.u32 16, %s14
        %s174 = ssub.s32 38, %s173
        %p175 = scmp.lt.s32.totalorder %s174, 16
        %s176 = scalar_select %p175, %s174, 16
        %s177 = smul.u32 128, %s176
        %p178 = scmp.lt.s32.totalorder %s173, 37
        %s179 = scalar_select %p178, %s173, 37
        %s180 = smul.addr %s179, 8
        %s181 = scalar_lea.vmem %s0, %s180
        %s182 = smul.u32 16, %s14
        %s183 = ssub.s32 38, %s182
        %p184 = scmp.lt.s32.totalorder %s183, 16
        %s185 = scalar_select %p184, %s183, 16
        %s186 = smul.u32 128, %s185
        %s187 = smul.u32 16, %s14
        %s188 = ssub.s32 38, %s187
        %p189 = scmp.lt.s32.totalorder %s188, 16
        %s190 = scalar_select %p189, %s188, 16
        %s191 = smul.u32 128, %s190
        %v192 = vld [vmem:[%s181] sm:$0xff]
        %v193 = vld [vmem:[%s181 + $0x8] sm:$0xff]
        %v194 = vld [vmem:[%s181 + $0x10] sm:$0xff]
        %v195 = vld [vmem:[%s181 + $0x18] sm:$0xff]
        %v196 = vld [vmem:[%s181 + $0x20] sm:$0xff]
        %v197 = vld [vmem:[%s181 + $0x28] sm:$0xff]
        %v198 = vld [vmem:[%s181 + $0x30] sm:$0xff]
        %v199 = vld [vmem:[%s181 + $0x38] sm:$0xff]
        %v200 = vld [vmem:[%s181 + $0x40] sm:$0xff]
        %v201 = vld [vmem:[%s181 + $0x48] sm:$0xff]
        %v202 = vld [vmem:[%s181 + $0x50] sm:$0xff]
        %v203 = vld [vmem:[%s181 + $0x58] sm:$0xff]
        %v204 = vld [vmem:[%s181 + $0x60] sm:$0xff]
        %v205 = vld [vmem:[%s181 + $0x68] sm:$0xff]
        %v206 = vld [vmem:[%s181 + $0x70] sm:$0xff]
        %v207 = vld [vmem:[%s181 + $0x78] sm:$0xff]
        %v208 = vld [vmem:[%s1] sm:$0xff]
        %v209 = vld [vmem:[%s1 + $0x8] sm:$0x3]
        %v210 = vld [vmem:[%s2] sm:$0x1]
        %v212 = vlaneseq
        %v213 = vshrl.u32 %v212, 7
        %v214 = vsub.s32 0, %v213
        %v215 = vrot.slane %v210, %v214
        %vm217 = vcmask 80896
        %v219 = vsel %vm217, %v192, 0
        %v222 = vsel %vm217, %v193, 0
        %v225 = vsel %vm217, %v194, 0
        %v228 = vsel %vm217, %v195, 0
        %v231 = vsel %vm217, %v196, 0
        %v234 = vsel %vm217, %v197, 0
        %v237 = vsel %vm217, %v198, 0
        %v240 = vsel %vm217, %v199, 0
        %v243 = vsel %vm217, %v200, 0
        %v246 = vsel %vm217, %v201, 0
        %v249 = vsel %vm217, %v202, 0
        %v252 = vsel %vm217, %v203, 0
        %v255 = vsel %vm217, %v204, 0
        %v258 = vsel %vm217, %v205, 0
        %v261 = vsel %vm217, %v206, 0
        %v264 = vsel %vm217, %v207, 0
        %vm266 = vcmask 1041408
        %v268 = vsel %vm266, %v209, 0
        %270 = vmatprep.subr.mxu0 0.0
        %271 = vmatpush1.msra.mxu0 0.0
        %272 = vmatprep.subr.mxu0 0.0
        %273 = vmatpush1.msra.mxu0 0.0
        %274 = vmatprep.subr.mxu0 0.0
        %275 = vmatpush1.msra.mxu0 0.0
        %276 = vmatprep.subr.mxu0 0.0
        %277 = vmatpush1.msra.mxu0 0.0
        %278 = vmatprep.subr.mxu0 0.0
        %279 = vmatpush1.msra.mxu0 0.0
        %280 = vmatprep.subr.mxu0 0.0
        %281 = vmatpush1.msra.mxu0 0.0
        %282 = vmatprep.subr.mxu0 0.0
        %283 = vmatpush1.msra.mxu0 0.0
        %284 = vmatprep.subr.mxu0 0.0
        %285 = vmatpush1.msra.mxu0 0.0
        %286 = vmatprep.subr.mxu0 0.0
        %287 = vmatpush1.msra.mxu0 0.0
        %288 = vmatprep.subr.mxu0 0.0
        %289 = vmatpush1.msra.mxu0 0.0
        %290 = vmatprep.subr.mxu0 0.0
        %291 = vmatpush1.msra.mxu0 0.0
        %292 = vmatprep.subr.mxu0 0.0
        %293 = vmatpush1.msra.mxu0 0.0
        %294 = vmatprep.subr.mxu0 0.0
        %295 = vmatpush1.msra.mxu0 0.0
        %296 = vmatprep.subr.mxu0 0.0
        %297 = vmatpush1.msra.mxu0 0.0
        %298 = vmatprep.subr.mxu0 0.0
        %299 = vmatpush1.msra.mxu0 %v268
        %300 = vmatprep.subr.mxu0 0.0
        %301 = vmatpush1.msra.mxu0 %v208
        %302 = vmatprep.subr.mxu0 0.0
        %303 = vmatpush2.msra.mxu0 0.0
        %304 = vmatprep.subr.mxu0 0.0
        %305 = vmatpush2.msra.mxu0 0.0
        %306 = vmatprep.subr.mxu0 0.0
        %307 = vmatpush2.msra.mxu0 0.0
        %308 = vmatprep.subr.mxu0 0.0
        %309 = vmatpush2.msra.mxu0 0.0
        %310 = vmatprep.subr.mxu0 0.0
        %311 = vmatpush2.msra.mxu0 0.0
        %312 = vmatprep.subr.mxu0 0.0
        %313 = vmatpush2.msra.mxu0 0.0
        %314 = vmatprep.subr.mxu0 0.0
        %315 = vmatpush2.msra.mxu0 0.0
        %316 = vmatprep.subr.mxu0 0.0
        %317 = vmatpush2.msra.mxu0 0.0
        %318 = vmatprep.subr.mxu0 0.0
        %319 = vmatpush2.msra.mxu0 0.0
        %320 = vmatprep.subr.mxu0 0.0
        %321 = vmatpush2.msra.mxu0 0.0
        %322 = vmatprep.subr.mxu0 0.0
        %323 = vmatpush2.msra.mxu0 0.0
        %324 = vmatprep.subr.mxu0 0.0
        %325 = vmatpush2.msra.mxu0 0.0
        %326 = vmatprep.subr.mxu0 0.0
        %327 = vmatpush2.msra.mxu0 0.0
        %328 = vmatprep.subr.mxu0 0.0
        %329 = vmatpush2.msra.mxu0 0.0
        %330 = vmatprep.subr.mxu0 0.0
        %331 = vmatpush2.msra.mxu0 0.0
        %332 = vmatprep.subr.mxu0 0.0
        %333 = vmatpush2.msra.mxu0 0.0
        %334 = vmatprep.mubr.f32.mxu0 0.0
        %335 = vmatmul.mubr.f32.gmra.mxu0 %v219
        %v336 = vpop.f32.mrf.mxu0
        %v337 = vadd.f32 %v215, %v336
        %v338 = vpop.f32.mrf.mxu0
        %339 = vmatprep.mubr.f32.mxu0 0.0
        %340 = vmatmul.mubr.f32.gmra.mxu0 %v222
        %v341 = vpop.f32.mrf.mxu0
        %v342 = vadd.f32 %v215, %v341
        %v343 = vpop.f32.mrf.mxu0
        %344 = vmatprep.mubr.f32.mxu0 0.0
        %345 = vmatmul.mubr.f32.gmra.mxu0 %v225
        %v346 = vpop.f32.mrf.mxu0
        %v347 = vadd.f32 %v215, %v346
        %v348 = vpop.f32.mrf.mxu0
        %349 = vmatprep.mubr.f32.mxu0 0.0
        %350 = vmatmul.mubr.f32.gmra.mxu0 %v228
        %v351 = vpop.f32.mrf.mxu0
        %v352 = vadd.f32 %v215, %v351
        %v353 = vpop.f32.mrf.mxu0
        %354 = vmatprep.mubr.f32.mxu0 0.0
        %355 = vmatmul.mubr.f32.gmra.mxu0 %v231
        %v356 = vpop.f32.mrf.mxu0
        %v357 = vadd.f32 %v215, %v356
        %v358 = vpop.f32.mrf.mxu0
        %359 = vmatprep.mubr.f32.mxu0 0.0
        %360 = vmatmul.mubr.f32.gmra.mxu0 %v234
        %v361 = vpop.f32.mrf.mxu0
        %v362 = vadd.f32 %v215, %v361
        %v363 = vpop.f32.mrf.mxu0
        %364 = vmatprep.mubr.f32.mxu0 0.0
        %365 = vmatmul.mubr.f32.gmra.mxu0 %v237
        %v366 = vpop.f32.mrf.mxu0
        %v367 = vadd.f32 %v215, %v366
        %v368 = vpop.f32.mrf.mxu0
        %369 = vmatprep.mubr.f32.mxu0 0.0
        %370 = vmatmul.mubr.f32.gmra.mxu0 %v240
        %v371 = vpop.f32.mrf.mxu0
        %v372 = vadd.f32 %v215, %v371
        %v373 = vpop.f32.mrf.mxu0
        %374 = vmatprep.mubr.f32.mxu0 0.0
        %375 = vmatmul.mubr.f32.gmra.mxu0 %v243
        %v376 = vpop.f32.mrf.mxu0
        %v377 = vadd.f32 %v215, %v376
        %v378 = vpop.f32.mrf.mxu0
        %379 = vmatprep.mubr.f32.mxu0 0.0
        %380 = vmatmul.mubr.f32.gmra.mxu0 %v246
        %v381 = vpop.f32.mrf.mxu0
        %v382 = vadd.f32 %v215, %v381
        %v383 = vpop.f32.mrf.mxu0
        %384 = vmatprep.mubr.f32.mxu0 0.0
        %385 = vmatmul.mubr.f32.gmra.mxu0 %v249
        %v386 = vpop.f32.mrf.mxu0
        %v387 = vadd.f32 %v215, %v386
        %v388 = vpop.f32.mrf.mxu0
        %389 = vmatprep.mubr.f32.mxu0 0.0
        %390 = vmatmul.mubr.f32.gmra.mxu0 %v252
        %v391 = vpop.f32.mrf.mxu0
        %v392 = vadd.f32 %v215, %v391
        %v393 = vpop.f32.mrf.mxu0
        %394 = vmatprep.mubr.f32.mxu0 0.0
        %395 = vmatmul.mubr.f32.gmra.mxu0 %v255
        %v396 = vpop.f32.mrf.mxu0
        %v397 = vadd.f32 %v215, %v396
        %v398 = vpop.f32.mrf.mxu0
        %399 = vmatprep.mubr.f32.mxu0 0.0
        %400 = vmatmul.mubr.f32.gmra.mxu0 %v258
        %v401 = vpop.f32.mrf.mxu0
        %v402 = vadd.f32 %v215, %v401
        %v403 = vpop.f32.mrf.mxu0
        %404 = vmatprep.mubr.f32.mxu0 0.0
        %405 = vmatmul.mubr.f32.gmra.mxu0 %v261
        %v406 = vpop.f32.mrf.mxu0
        %v407 = vadd.f32 %v215, %v406
        %v408 = vpop.f32.mrf.mxu0
        %409 = vmatprep.mubr.f32.mxu0 0.0
        %410 = vmatmul.mubr.f32.gmra.mxu0 %v264
        %v411 = vpop.f32.mrf.mxu0
        %v412 = vadd.f32 %v215, %v411
        %v413 = vpop.f32.mrf.mxu0
        %414 = vdwg.mxu0
        %vm415 = vcmask 39936
        %416 = vst.msk [vmem:[%s172] sm:$0xff] %vm415, %v337
        %417 = vst.msk [vmem:[%s172 + $0x8] sm:$0xff] %vm415, %v342
        %418 = vst.msk [vmem:[%s172 + $0x10] sm:$0xff] %vm415, %v347
        %419 = vst.msk [vmem:[%s172 + $0x18] sm:$0xff] %vm415, %v352
        %420 = vst.msk [vmem:[%s172 + $0x20] sm:$0xff] %vm415, %v357
        %421 = vst.msk [vmem:[%s172 + $0x28] sm:$0xff] %vm415, %v362
        %422 = vst.msk [vmem:[%s172 + $0x30] sm:$0xff] %vm415, %v367
        %423 = vst.msk [vmem:[%s172 + $0x38] sm:$0xff] %vm415, %v372
        %424 = vst.msk [vmem:[%s172 + $0x40] sm:$0xff] %vm415, %v377
        %425 = vst.msk [vmem:[%s172 + $0x48] sm:$0xff] %vm415, %v382
        %426 = vst.msk [vmem:[%s172 + $0x50] sm:$0xff] %vm415, %v387
        %427 = vst.msk [vmem:[%s172 + $0x58] sm:$0xff] %vm415, %v392
        %428 = vst.msk [vmem:[%s172 + $0x60] sm:$0xff] %vm415, %v397
        %429 = vst.msk [vmem:[%s172 + $0x68] sm:$0xff] %vm415, %v402
        %430 = vst.msk [vmem:[%s172 + $0x70] sm:$0xff] %vm415, %v407
        %431 = vst.msk [vmem:[%s172 + $0x78] sm:$0xff] %vm415, %v412
        %s432 = sand.u32 %s90, 1
        %s433 = sand.u32 %s90, 1
        %s434 = smul.addr %s433, 128
        %s435 = scalar_lea.vmem [#allocation2], %s434
        // Predicated region
        $region33: #{tpu_custom_call.1} parent=31 // pred_check
          %p436 = pneg %p100
        $region34: #{tpu_custom_call.1} parent=31 // pred_check_branch
          %438 = sbr.rel (%p436) target = $region36
        $region35: #{tpu_custom_call.1} parent=31 // pred_region
          %s439 = smul.u32 16, %s14
          %s440 = ssub.s32 38, %s439
          %p441 = scmp.lt.s32.totalorder %s440, 16
          %s442 = scalar_select %p441, %s440, 16
          %s443 = smul.u32 128, %s442
          %p444 = scmp.ne.s32.totalorder 0, %s443
          %s445 = smul.addr %s439, 8
          %s446 = scalar_lea.vmem %s3, %s445
          // Predicated region
          $region37: #{tpu_custom_call.1} parent=35 // pred_check
            %p447 = pneg %p444
          $region38: #{tpu_custom_call.1} parent=35 // pred_check_branch
            %449 = sbr.rel (%p447) target = $region40
          $region39: #{tpu_custom_call.1} parent=35 // pred_region
            // Predicated region
            $region41: #{tpu_custom_call.1} parent=39 // pred_check
              _
            $region42: #{tpu_custom_call.1} parent=39 // pred_check_branch
              %451 = sbr.rel (0) target = $region44
            $region43: #{tpu_custom_call.1} parent=39 // pred_region
              // Predicated region
              $region63: #{tpu_custom_call.1} parent=43 // pred_check
                _
              $region64: #{tpu_custom_call.1} parent=43 // pred_check_branch
                %531 = sbr.rel (0) target = $region66
              $region65: #{tpu_custom_call.1} parent=43 // pred_region
                %s532 = sshrl.u32 %s442, 4
                // While loop
                $region67: #{tpu_custom_call.1} parent=65 // loop_pre_header
                  _
                $region68: #{tpu_custom_call.1} parent=65 // loop_header
                  %s534 = sphi 0, %s536
                  %p535 = scmp.ge.s32.totalorder %s534, %s532
                  %s539 = sphi 0, %s576
                  %s540 = sphi %s435, %s579
                  %s541 = sphi %s446, %s580
                $region69: #{tpu_custom_call.1} parent=65 // loop_header_branch
                  %538 = sbr.rel (%p535) target = $region73
                $region70: #{tpu_custom_call.1} parent=65 // loop_body
                  %v542 = vld [vmem:[%s540] sm:$0xff]
                  %543 = vst [vmem:[%s541] sm:$0xff] %v542
                  %v544 = vld [vmem:[%s540 + $0x8] sm:$0xff]
                  %545 = vst [vmem:[%s541 + $0x8] sm:$0xff] %v544
                  %v546 = vld [vmem:[%s540 + $0x10] sm:$0xff]
                  %547 = vst [vmem:[%s541 + $0x10] sm:$0xff] %v546
                  %v548 = vld [vmem:[%s540 + $0x18] sm:$0xff]
                  %549 = vst [vmem:[%s541 + $0x18] sm:$0xff] %v548
                  %v550 = vld [vmem:[%s540 + $0x20] sm:$0xff]
                  %551 = vst [vmem:[%s541 + $0x20] sm:$0xff] %v550
                  %v552 = vld [vmem:[%s540 + $0x28] sm:$0xff]
                  %553 = vst [vmem:[%s541 + $0x28] sm:$0xff] %v552
                  %v554 = vld [vmem:[%s540 + $0x30] sm:$0xff]
                  %555 = vst [vmem:[%s541 + $0x30] sm:$0xff] %v554
                  %v556 = vld [vmem:[%s540 + $0x38] sm:$0xff]
                  %557 = vst [vmem:[%s541 + $0x38] sm:$0xff] %v556
                  %v558 = vld [vmem:[%s540 + $0x40] sm:$0xff]
                  %559 = vst [vmem:[%s541 + $0x40] sm:$0xff] %v558
                  %v560 = vld [vmem:[%s540 + $0x48] sm:$0xff]
                  %561 = vst [vmem:[%s541 + $0x48] sm:$0xff] %v560
                  %v562 = vld [vmem:[%s540 + $0x50] sm:$0xff]
                  %563 = vst [vmem:[%s541 + $0x50] sm:$0xff] %v562
                  %v564 = vld [vmem:[%s540 + $0x58] sm:$0xff]
                  %565 = vst [vmem:[%s541 + $0x58] sm:$0xff] %v564
                  %v566 = vld [vmem:[%s540 + $0x60] sm:$0xff]
                  %567 = vst [vmem:[%s541 + $0x60] sm:$0xff] %v566
                  %v568 = vld [vmem:[%s540 + $0x68] sm:$0xff]
                  %569 = vst [vmem:[%s541 + $0x68] sm:$0xff] %v568
                  %v570 = vld [vmem:[%s540 + $0x70] sm:$0xff]
                  %571 = vst [vmem:[%s541 + $0x70] sm:$0xff] %v570
                  %v572 = vld [vmem:[%s540 + $0x78] sm:$0xff]
                  %573 = vst [vmem:[%s541 + $0x78] sm:$0xff] %v572
                  %s574 = sadd.s32 1, %s539
                  %p575 = scmp.ge.s32.totalorder %s574, %s532
                  %s576 = scalar_select %p575, 0, %s574
                  %s577 = smul.u32 %s576, 128
                  %s578 = smul.u32 %s576, 128
                  %s579 = scalar_lea.vmem %s435, %s577 [#allocation2]
                  %s580 = scalar_lea.vmem %s446, %s578
                $region71: #{tpu_custom_call.1} parent=65 // loop_footer
                  %s536 = sadd.s32 %s534, 1
                $region72: #{tpu_custom_call.1} parent=65 // loop_footer_branch
                  %533 = sbr.rel target = $region68
                $region73: #{tpu_custom_call.1} parent=65 // loop_exit
                  _
                %s581 = sshrl.u32 %s442, 4
                %s582 = sand.u32 %s442, 15
                %s583 = smul.u32 %s581, 16
                %s584 = smul.u32 8, %s583
                %s585 = scalar_lea.vmem %s435, %s584 [#allocation2]
                %s586 = smul.u32 8, %s583
                %s587 = scalar_lea.vmem %s446, %s586
                // While loop
                $region74: #{tpu_custom_call.1} parent=65 // loop_pre_header
                  _
                $region75: #{tpu_custom_call.1} parent=65 // loop_header
                  %s589 = sphi 0, %s591
                  %p590 = scmp.ge.s32.totalorder %s589, %s582
                  %s594 = sphi 0, %s601
                  %s595 = sphi %s585, %s604
                  %s596 = sphi %s587, %s605
                $region76: #{tpu_custom_call.1} parent=65 // loop_header_branch
                  %593 = sbr.rel (%p590) target = $region80
                $region77: #{tpu_custom_call.1} parent=65 // loop_body
                  %v597 = vld [vmem:[%s595] sm:$0xff]
                  %598 = vst [vmem:[%s596] sm:$0xff] %v597
                  %s599 = sadd.s32 1, %s594
                  %p600 = scmp.ge.s32.totalorder %s599, %s582
                  %s601 = scalar_select %p600, 0, %s599
                  %s602 = smul.u32 %s601, 8
                  %s603 = smul.u32 %s601, 8
                  %s604 = scalar_lea.vmem %s585, %s602 [#allocation2]
                  %s605 = scalar_lea.vmem %s587, %s603
                $region78: #{tpu_custom_call.1} parent=65 // loop_footer
                  %s591 = sadd.s32 %s589, 1
                $region79: #{tpu_custom_call.1} parent=65 // loop_footer_branch
                  %588 = sbr.rel target = $region75
                $region80: #{tpu_custom_call.1} parent=65 // loop_exit
                  _
              $region66: #{tpu_custom_call.1} parent=43 // pred_fallthru
                _
              // Predicated region
              $region81: #{tpu_custom_call.1} parent=43 // pred_check
                _
              $region82: #{tpu_custom_call.1} parent=43 // pred_check_branch
                %607 = sbr.rel target = $region84
              $region83: #{tpu_custom_call.1} parent=43 // pred_region
                _
              $region84: #{tpu_custom_call.1} parent=43 // pred_fallthru
                _
            $region44: #{tpu_custom_call.1} parent=39 // pred_fallthru
              _
            // Predicated region
            $region45: #{tpu_custom_call.1} parent=39 // pred_check
              _
            $region46: #{tpu_custom_call.1} parent=39 // pred_check_branch
              %453 = sbr.rel target = $region48
            $region47: #{tpu_custom_call.1} parent=39 // pred_region
              %s455 = ssub.s32 256, 1
              %s456 = sshrl.u32 %s442, 4
              // While loop
              $region49: #{tpu_custom_call.1} parent=47 // loop_pre_header
                _
              $region50: #{tpu_custom_call.1} parent=47 // loop_header
                %s458 = sphi 0, %s460
                %p459 = scmp.ge.s32.totalorder %s458, %s456
                %s463 = sphi 0, %s500
                %s464 = sphi %s435, %s503
                %s465 = sphi %s446, %s504
              $region51: #{tpu_custom_call.1} parent=47 // loop_header_branch
                %462 = sbr.rel (%p459) target = $region55
              $region52: #{tpu_custom_call.1} parent=47 // loop_body
                %v466 = vld [vmem:[%s464] sm:%s455]
                %467 = vst [vmem:[%s465] sm:%s455] %v466
                %v468 = vld [vmem:[%s464 + $0x8] sm:%s455]
                %469 = vst [vmem:[%s465 + $0x8] sm:%s455] %v468
                %v470 = vld [vmem:[%s464 + $0x10] sm:%s455]
                %471 = vst [vmem:[%s465 + $0x10] sm:%s455] %v470
                %v472 = vld [vmem:[%s464 + $0x18] sm:%s455]
                %473 = vst [vmem:[%s465 + $0x18] sm:%s455] %v472
                %v474 = vld [vmem:[%s464 + $0x20] sm:%s455]
                %475 = vst [vmem:[%s465 + $0x20] sm:%s455] %v474
                %v476 = vld [vmem:[%s464 + $0x28] sm:%s455]
                %477 = vst [vmem:[%s465 + $0x28] sm:%s455] %v476
                %v478 = vld [vmem:[%s464 + $0x30] sm:%s455]
                %479 = vst [vmem:[%s465 + $0x30] sm:%s455] %v478
                %v480 = vld [vmem:[%s464 + $0x38] sm:%s455]
                %481 = vst [vmem:[%s465 + $0x38] sm:%s455] %v480
                %v482 = vld [vmem:[%s464 + $0x40] sm:%s455]
                %483 = vst [vmem:[%s465 + $0x40] sm:%s455] %v482
                %v484 = vld [vmem:[%s464 + $0x48] sm:%s455]
                %485 = vst [vmem:[%s465 + $0x48] sm:%s455] %v484
                %v486 = vld [vmem:[%s464 + $0x50] sm:%s455]
                %487 = vst [vmem:[%s465 + $0x50] sm:%s455] %v486
                %v488 = vld [vmem:[%s464 + $0x58] sm:%s455]
                %489 = vst [vmem:[%s465 + $0x58] sm:%s455] %v488
                %v490 = vld [vmem:[%s464 + $0x60] sm:%s455]
                %491 = vst [vmem:[%s465 + $0x60] sm:%s455] %v490
                %v492 = vld [vmem:[%s464 + $0x68] sm:%s455]
                %493 = vst [vmem:[%s465 + $0x68] sm:%s455] %v492
                %v494 = vld [vmem:[%s464 + $0x70] sm:%s455]
                %495 = vst [vmem:[%s465 + $0x70] sm:%s455] %v494
                %v496 = vld [vmem:[%s464 + $0x78] sm:%s455]
                %497 = vst [vmem:[%s465 + $0x78] sm:%s455] %v496
                %s498 = sadd.s32 1, %s463
                %p499 = scmp.ge.s32.totalorder %s498, %s456
                %s500 = scalar_select %p499, 0, %s498
                %s501 = smul.u32 %s500, 128
                %s502 = smul.u32 %s500, 128
                %s503 = scalar_lea.vmem %s435, %s501 [#allocation2]
                %s504 = scalar_lea.vmem %s446, %s502
              $region53: #{tpu_custom_call.1} parent=47 // loop_footer
                %s460 = sadd.s32 %s458, 1
              $region54: #{tpu_custom_call.1} parent=47 // loop_footer_branch
                %457 = sbr.rel target = $region50
              $region55: #{tpu_custom_call.1} parent=47 // loop_exit
                _
              %s505 = sshrl.u32 %s442, 4
              %s506 = sand.u32 %s442, 15
              %s507 = smul.u32 %s505, 16
              %s508 = smul.u32 8, %s507
              %s509 = scalar_lea.vmem %s435, %s508 [#allocation2]
              %s510 = smul.u32 8, %s507
              %s511 = scalar_lea.vmem %s446, %s510
              // While loop
              $region56: #{tpu_custom_call.1} parent=47 // loop_pre_header
                _
              $region57: #{tpu_custom_call.1} parent=47 // loop_header
                %s513 = sphi 0, %s515
                %p514 = scmp.ge.s32.totalorder %s513, %s506
                %s518 = sphi 0, %s525
                %s519 = sphi %s509, %s528
                %s520 = sphi %s511, %s529
              $region58: #{tpu_custom_call.1} parent=47 // loop_header_branch
                %517 = sbr.rel (%p514) target = $region62
              $region59: #{tpu_custom_call.1} parent=47 // loop_body
                %v521 = vld [vmem:[%s519] sm:%s455]
                %522 = vst [vmem:[%s520] sm:%s455] %v521
                %s523 = sadd.s32 1, %s518
                %p524 = scmp.ge.s32.totalorder %s523, %s506
                %s525 = scalar_select %p524, 0, %s523
                %s526 = smul.u32 %s525, 8
                %s527 = smul.u32 %s525, 8
                %s528 = scalar_lea.vmem %s509, %s526 [#allocation2]
                %s529 = scalar_lea.vmem %s511, %s527
              $region60: #{tpu_custom_call.1} parent=47 // loop_footer
                %s515 = sadd.s32 %s513, 1
              $region61: #{tpu_custom_call.1} parent=47 // loop_footer_branch
                %512 = sbr.rel target = $region57
              $region62: #{tpu_custom_call.1} parent=47 // loop_exit
                _
            $region48: #{tpu_custom_call.1} parent=39 // pred_fallthru
              _
          $region40: #{tpu_custom_call.1} parent=35 // pred_fallthru
            _
          %608 = vnop
        $region36: #{tpu_custom_call.1} parent=31 // pred_fallthru
          _
      $region32: #{tpu_custom_call.1} parent=5 // pred_fallthru
        _
      %p609 = scmp.le.s32.totalorder 2, %s9
      // Predicated region
      $region85: #{tpu_custom_call.1} parent=5 // pred_check
        %p610 = pneg %p609
      $region86: #{tpu_custom_call.1} parent=5 // pred_check_branch
        %612 = sbr.rel (%p610) target = $region88
      $region87: #{tpu_custom_call.1} parent=5 // pred_region
        %s613 = ssub.s32 %s9, 2
        // Predicated region
        $region89: #{tpu_custom_call.1} parent=87 // pred_check
          %p614 = pneg %p106
        $region90: #{tpu_custom_call.1} parent=87 // pred_check_branch
          %616 = sbr.rel (%p614) target = $region92
        $region91: #{tpu_custom_call.1} parent=87 // pred_region
          %s617 = sand.u32 %s91, 1
          %s618 = sand.u32 %s91, 1
          %s619 = smul.addr %s618, 128
          %s620 = scalar_lea.vmem [#allocation2], %s619
        $region92: #{tpu_custom_call.1} parent=87 // pred_fallthru
          _
      $region88: #{tpu_custom_call.1} parent=5 // pred_fallthru
        _
    $region6: #{tpu_custom_call.1} parent=1 // loop_footer
      %s13 = sadd.s32 1, %s9
    $region7: #{tpu_custom_call.1} parent=1 // loop_footer_branch
      %8 = sbr.rel target = $region3
    $region8: #{tpu_custom_call.1} parent=1 // loop_exit
      _

</llo_original>
